<compile_context>
chip_gen: v6e
topology: v6e:2x2x1
jax: 0.10.0
libtpu: 0.0.40
codegen_flags: <defaults>
</compile_context>

<pallas_src>
import functools

import jax
import jax.numpy as jnp
from jax import lax
from jax.experimental import pallas as pl
from jax.experimental.pallas import tpu as pltpu

C_IN = 6    # encoder in-channels / decoder out-channels
C_LAT = 3   # latent channels

LANES = 128
SUBLANES = 8

# Offsets into the packed SMEM parameter vector.
_WE_OFF = 0                              # we[oc, ic] : (3, 6)
_BE_OFF = _WE_OFF + C_LAT * C_IN         # be[oc]     : (3,)
_WD_OFF = _BE_OFF + C_LAT                # wd[oc, ic] : (6, 3)
_BD_OFF = _WD_OFF + C_IN * C_LAT         # bd[oc]     : (6,)
_N_PARAMS = _BD_OFF + C_IN               # 45 floats total


def _cdiv(a, b):
    return -(-a // b)


def _round_up(x, m):
    return ((x + m - 1) // m) * m


def _ae_kernel(params_ref, x_ref, enc_ref, dec_ref, *, chunk_rows):
    # params_ref: (45,) f32 in SMEM.
    # x_ref:   (C_IN,  R, 128) f32 -- per-channel dense (sublane, lane) pixel slabs.
    # enc_ref: (C_LAT, R, 128)
    # dec_ref: (C_IN,  R, 128)

    # Hoist every scalar parameter read out of the chunk loop (kernel prologue).
    we = [[params_ref[_WE_OFF + oc * C_IN + ic] for ic in range(C_IN)]
          for oc in range(C_LAT)]
    be = [params_ref[_BE_OFF + oc] for oc in range(C_LAT)]
    wd = [[params_ref[_WD_OFF + oc * C_LAT + ic] for ic in range(C_LAT)]
          for oc in range(C_IN)]
    bd = [params_ref[_BD_OFF + oc] for oc in range(C_IN)]

    n_chunks = x_ref.shape[1] // chunk_rows   # static; row_tile % chunk_rows == 0

    def body(c, carry):
        r0 = pl.multiple_of(c * chunk_rows, chunk_rows)
        rows = pl.ds(r0, chunk_rows)

        # Load the 6 input-channel slabs for this chunk (stay in vregs).
        xs = [x_ref[ic, rows, :] for ic in range(C_IN)]          # each (chunk, 128)

        # Encoder: h[oc] = relu(sum_ic we[oc, ic] * x[ic] + be[oc])  (VPU FMAs)
        hs = []
        for oc in range(C_LAT):
            acc = xs[0] * we[oc][0]
            for ic in range(1, C_IN):
                acc = acc + xs[ic] * we[oc][ic]
            h = jnp.maximum(acc + be[oc], 0.0)
            enc_ref[oc, rows, :] = h.astype(enc_ref.dtype)        # direct dense store
            hs.append(h)                                          # kept in vregs

        # Decoder: z[oc] = relu(sum_ic wd[oc, ic] * h[ic] + bd[oc])
        for oc in range(C_IN):
            acc = hs[0] * wd[oc][0]
            for ic in range(1, C_LAT):
                acc = acc + hs[ic] * wd[oc][ic]
            dec_ref[oc, rows, :] = jnp.maximum(acc + bd[oc], 0.0).astype(dec_ref.dtype)

        return carry

    lax.fori_loop(0, n_chunks, body, 0)


def autoencoder_forward(x_nchw, w_enc, b_enc, w_dec, b_dec, *, row_tile_max=1024):
    """
    x_nchw : (N, 6, H, W) float32
    w_enc  : (3, 6, 1, 1)  -- nn.Conv2d(6, 3, 1) weight
    b_enc  : (3,)
    w_dec  : (3, 6, 1, 1)  -- nn.ConvTranspose2d(3, 6, 1) weight (in, out, kH, kW)
    b_dec  : (6,)
    returns (x_1, x) in NCHW, matching the PyTorch module forward.
    """
    N, C, H, W = x_nchw.shape
    assert C == C_IN
    HW = H * W

    # ---- choose pixel tiling: pixels become (rows, 128) slabs per channel -------------
    r_min = _round_up(HW, LANES) // LANES                 # rows needed (lane-padded)
    num_tiles = _cdiv(r_min, row_tile_max)
    if N == 1 and num_tiles == 1 and r_min >= 2 * SUBLANES:
        num_tiles = 2                                     # give v7x's 2nd TC work
    row_tile = _round_up(_cdiv(r_min, num_tiles), SUBLANES)
    r_pad = row_tile * num_tiles                          # rows, multiple of row_tile
    hw_pad = r_pad * LANES                                # pixels, waste <= ~8*128/tile
    chunk_rows = 16 if row_tile % 16 == 0 else SUBLANES   # 1-2 vregs / channel / chunk

    # NCHW -> (N, C, H*W): pure reshape, no transpose.  Pad only to the (8 x 128) unit,
    # and skip the pad entirely when already aligned.
    x3 = x_nchw.reshape(N, C_IN, HW).astype(jnp.float32)
    if hw_pad != HW:
        x3 = jnp.pad(x3, ((0, 0), (0, 0), (0, hw_pad - HW)))
    x4 = x3.reshape(N, C_IN, r_pad, LANES)                # pure reshape

    # Pack all weights/biases into one small SMEM vector (scalar-broadcast FMAs).
    we = w_enc[:, :, 0, 0]                                # (3, 6): we[oc, ic]
    wd = jnp.transpose(w_dec[:, :, 0, 0])                 # (6, 3): wd[oc, ic] = w_dec[ic, oc]
    params = jnp.concatenate([
        we.reshape(-1), b_enc.reshape(-1), wd.reshape(-1), b_dec.reshape(-1),
    ]).astype(jnp.float32)
    assert params.shape[0] == _N_PARAMS

    grid = (N, num_tiles)
    kernel = functools.partial(_ae_kernel, chunk_rows=chunk_rows)

    enc, dec = pl.pallas_call(
        kernel,
        out_shape=(
            jax.ShapeDtypeStruct((N, C_LAT, r_pad, LANES), jnp.float32),
            jax.ShapeDtypeStruct((N, C_IN, r_pad, LANES), jnp.float32),
        ),
        grid_spec=pltpu.PrefetchScalarGridSpec(
            num_scalar_prefetch=0,
            grid=grid,
            in_specs=[
                pl.BlockSpec(memory_space=pltpu.MemorySpace.SMEM),         # params (45,)
                pl.BlockSpec((None, C_IN, row_tile, LANES),
                             lambda n, t: (n, 0, t, 0)),                   # x tile
            ],
            out_specs=[
                pl.BlockSpec((None, C_LAT, row_tile, LANES),
                             lambda n, t: (n, 0, t, 0)),                   # encoder out
                pl.BlockSpec((None, C_IN, row_tile, LANES),
                             lambda n, t: (n, 0, t, 0)),                   # decoder out
            ],
        ),
        compiler_params=pltpu.CompilerParams(
            dimension_semantics=("parallel", "parallel"),
            vmem_limit_bytes=40 * 1024 * 1024,
        ),
    )(params, x4)

    # (N, C, rows, 128) -> (N, C, hw_pad) -> drop padding (only if added) -> NCHW.
    enc = enc.reshape(N, C_LAT, hw_pad)
    dec = dec.reshape(N, C_IN, hw_pad)
    if hw_pad != HW:
        enc = enc[:, :, :HW]
        dec = dec[:, :, :HW]
    x_1 = enc.reshape(N, C_LAT, H, W)
    x_out = dec.reshape(N, C_IN, H, W)
    return x_1, x_out
    # TODO(synk): optional bf16 I/O variant (numerics-visible) would halve HBM traffic.


def _reference_forward(x_nchw, w_enc, b_enc, w_dec, b_dec):
    # Pure-JAX reference of the PyTorch forward (1x1 convs == per-pixel channel matmuls).
    we = w_enc[:, :, 0, 0]                                   # (3, 6): [out, in]
    wd = w_dec[:, :, 0, 0]                                   # (3, 6): [in, out]
    h = jnp.einsum("oi,nihw->nohw", we, x_nchw) + b_enc[None, :, None, None]
    h = jnp.maximum(h, 0.0)
    z = jnp.einsum("io,nihw->nohw", wd, h) + b_dec[None, :, None, None]
    return h, jnp.maximum(z, 0.0)


if __name__ == "__main__":
    key = jax.random.PRNGKey(0)
    k_x, k_we, k_be, k_wd, k_bd = jax.random.split(key, 5)

    N, H, W = 2, 16, 16
    x = jax.random.normal(k_x, (N, C_IN, H, W), dtype=jnp.float32)

    # Deterministic synthetic parameters (shapes match nn.Conv2d(6,3,1) /
    # nn.ConvTranspose2d(3,6,1)); not a checkpoint load.
    w_enc = jax.random.normal(k_we, (C_LAT, C_IN, 1, 1), dtype=jnp.float32) * 0.3
    b_enc = jax.random.normal(k_be, (C_LAT,), dtype=jnp.float32) * 0.1
    w_dec = jax.random.normal(k_wd, (C_LAT, C_IN, 1, 1), dtype=jnp.float32) * 0.3
    b_dec = jax.random.normal(k_bd, (C_IN,), dtype=jnp.float32) * 0.1

    x_1, x_out = autoencoder_forward(x, w_enc, b_enc, w_dec, b_dec)
    x_1, x_out = jax.block_until_ready((x_1, x_out))

    ref_1, ref_out = _reference_forward(x, w_enc, b_enc, w_dec, b_dec)
    assert x_1.shape == (N, C_LAT, H, W) and x_out.shape == (N, C_IN, H, W)
    assert jnp.allclose(x_1, ref_1, atol=1e-5, rtol=1e-5)
    assert jnp.allclose(x_out, ref_out, atol=1e-5, rtol=1e-5)

    print("KERNEL_OK")
</pallas_src>

<mosaic_0001>
module attributes {stable_mosaic.version = 11 : i64} {
  func.func @_ae_kernel(%arg0: i32, %arg1: i32, %arg2: memref<45xf32, #tpu.memory_space<smem>>, %arg3: memref<1x6x8x128xf32, #tpu.memory_space<vmem>>, %arg4: memref<1x3x8x128xf32, #tpu.memory_space<vmem>>, %arg5: memref<1x6x8x128xf32, #tpu.memory_space<vmem>>) attributes {dimension_semantics = [#tpu.dimension_semantics<parallel>, #tpu.dimension_semantics<parallel>], iteration_bounds = array<i64: 2, 1>, scalar_prefetch = 0 : i64, scratch_operands = 0 : i64, tpu.core_type = #tpu.core_type<tc>, window_params = [{transform_indices = @transform_0, window_bounds = array<i64: 45>}, {transform_indices = @transform_1, window_bounds = array<i64: 1, 6, 8, 128>}, {transform_indices = @transform_2, window_bounds = array<i64: 1, 3, 8, 128>}, {transform_indices = @transform_3, window_bounds = array<i64: 1, 6, 8, 128>}]} {
    %c0 = arith.constant 0 : index
    %0 = memref.load %arg2[%c0] : memref<45xf32, #tpu.memory_space<smem>>
    %c1 = arith.constant 1 : index
    %1 = memref.load %arg2[%c1] : memref<45xf32, #tpu.memory_space<smem>>
    %c2 = arith.constant 2 : index
    %2 = memref.load %arg2[%c2] : memref<45xf32, #tpu.memory_space<smem>>
    %c3 = arith.constant 3 : index
    %3 = memref.load %arg2[%c3] : memref<45xf32, #tpu.memory_space<smem>>
    %c4 = arith.constant 4 : index
    %4 = memref.load %arg2[%c4] : memref<45xf32, #tpu.memory_space<smem>>
    %c5 = arith.constant 5 : index
    %5 = memref.load %arg2[%c5] : memref<45xf32, #tpu.memory_space<smem>>
    %c6 = arith.constant 6 : index
    %6 = memref.load %arg2[%c6] : memref<45xf32, #tpu.memory_space<smem>>
    %c7 = arith.constant 7 : index
    %7 = memref.load %arg2[%c7] : memref<45xf32, #tpu.memory_space<smem>>
    %c8 = arith.constant 8 : index
    %8 = memref.load %arg2[%c8] : memref<45xf32, #tpu.memory_space<smem>>
    %c9 = arith.constant 9 : index
    %9 = memref.load %arg2[%c9] : memref<45xf32, #tpu.memory_space<smem>>
    %c10 = arith.constant 10 : index
    %10 = memref.load %arg2[%c10] : memref<45xf32, #tpu.memory_space<smem>>
    %c11 = arith.constant 11 : index
    %11 = memref.load %arg2[%c11] : memref<45xf32, #tpu.memory_space<smem>>
    %c12 = arith.constant 12 : index
    %12 = memref.load %arg2[%c12] : memref<45xf32, #tpu.memory_space<smem>>
    %c13 = arith.constant 13 : index
    %13 = memref.load %arg2[%c13] : memref<45xf32, #tpu.memory_space<smem>>
    %c14 = arith.constant 14 : index
    %14 = memref.load %arg2[%c14] : memref<45xf32, #tpu.memory_space<smem>>
    %c15 = arith.constant 15 : index
    %15 = memref.load %arg2[%c15] : memref<45xf32, #tpu.memory_space<smem>>
    %c16 = arith.constant 16 : index
    %16 = memref.load %arg2[%c16] : memref<45xf32, #tpu.memory_space<smem>>
    %c17 = arith.constant 17 : index
    %17 = memref.load %arg2[%c17] : memref<45xf32, #tpu.memory_space<smem>>
    %c18 = arith.constant 18 : index
    %18 = memref.load %arg2[%c18] : memref<45xf32, #tpu.memory_space<smem>>
    %c19 = arith.constant 19 : index
    %19 = memref.load %arg2[%c19] : memref<45xf32, #tpu.memory_space<smem>>
    %c20 = arith.constant 20 : index
    %20 = memref.load %arg2[%c20] : memref<45xf32, #tpu.memory_space<smem>>
    %c21 = arith.constant 21 : index
    %21 = memref.load %arg2[%c21] : memref<45xf32, #tpu.memory_space<smem>>
    %c22 = arith.constant 22 : index
    %22 = memref.load %arg2[%c22] : memref<45xf32, #tpu.memory_space<smem>>
    %c23 = arith.constant 23 : index
    %23 = memref.load %arg2[%c23] : memref<45xf32, #tpu.memory_space<smem>>
    %c24 = arith.constant 24 : index
    %24 = memref.load %arg2[%c24] : memref<45xf32, #tpu.memory_space<smem>>
    %c25 = arith.constant 25 : index
    %25 = memref.load %arg2[%c25] : memref<45xf32, #tpu.memory_space<smem>>
    %c26 = arith.constant 26 : index
    %26 = memref.load %arg2[%c26] : memref<45xf32, #tpu.memory_space<smem>>
    %c27 = arith.constant 27 : index
    %27 = memref.load %arg2[%c27] : memref<45xf32, #tpu.memory_space<smem>>
    %c28 = arith.constant 28 : index
    %28 = memref.load %arg2[%c28] : memref<45xf32, #tpu.memory_space<smem>>
    %c29 = arith.constant 29 : index
    %29 = memref.load %arg2[%c29] : memref<45xf32, #tpu.memory_space<smem>>
    %c30 = arith.constant 30 : index
    %30 = memref.load %arg2[%c30] : memref<45xf32, #tpu.memory_space<smem>>
    %c31 = arith.constant 31 : index
    %31 = memref.load %arg2[%c31] : memref<45xf32, #tpu.memory_space<smem>>
    %c32 = arith.constant 32 : index
    %32 = memref.load %arg2[%c32] : memref<45xf32, #tpu.memory_space<smem>>
    %c33 = arith.constant 33 : index
    %33 = memref.load %arg2[%c33] : memref<45xf32, #tpu.memory_space<smem>>
    %c34 = arith.constant 34 : index
    %34 = memref.load %arg2[%c34] : memref<45xf32, #tpu.memory_space<smem>>
    %c35 = arith.constant 35 : index
    %35 = memref.load %arg2[%c35] : memref<45xf32, #tpu.memory_space<smem>>
    %c36 = arith.constant 36 : index
    %36 = memref.load %arg2[%c36] : memref<45xf32, #tpu.memory_space<smem>>
    %c37 = arith.constant 37 : index
    %37 = memref.load %arg2[%c37] : memref<45xf32, #tpu.memory_space<smem>>
    %c38 = arith.constant 38 : index
    %38 = memref.load %arg2[%c38] : memref<45xf32, #tpu.memory_space<smem>>
    %c39 = arith.constant 39 : index
    %39 = memref.load %arg2[%c39] : memref<45xf32, #tpu.memory_space<smem>>
    %c40 = arith.constant 40 : index
    %40 = memref.load %arg2[%c40] : memref<45xf32, #tpu.memory_space<smem>>
    %c41 = arith.constant 41 : index
    %41 = memref.load %arg2[%c41] : memref<45xf32, #tpu.memory_space<smem>>
    %c42 = arith.constant 42 : index
    %42 = memref.load %arg2[%c42] : memref<45xf32, #tpu.memory_space<smem>>
    %c43 = arith.constant 43 : index
    %43 = memref.load %arg2[%c43] : memref<45xf32, #tpu.memory_space<smem>>
    %c44 = arith.constant 44 : index
    %44 = memref.load %arg2[%c44] : memref<45xf32, #tpu.memory_space<smem>>
    %c0_i32 = arith.constant 0 : i32
    %c8_i32 = arith.constant 8 : i32
    %45 = arith.muli %c0_i32, %c8_i32 : i32
    %46 = tpu.assume_multiple %45, 8 : i32
    %c0_0 = arith.constant 0 : index
    %c0_1 = arith.constant 0 : index
    %47 = arith.index_cast %46 : i32 to index
    %c0_2 = arith.constant 0 : index
    %48 = vector.load %arg3[%c0_0, %c0_1, %47, %c0_2] : memref<1x6x8x128xf32, #tpu.memory_space<vmem>>, vector<1x1x8x128xf32>
    %49 = vector.shape_cast %48 : vector<1x1x8x128xf32> to vector<8x128xf32>
    %c0_3 = arith.constant 0 : index
    %c1_4 = arith.constant 1 : index
    %50 = arith.index_cast %46 : i32 to index
    %c0_5 = arith.constant 0 : index
    %51 = vector.load %arg3[%c0_3, %c1_4, %50, %c0_5] : memref<1x6x8x128xf32, #tpu.memory_space<vmem>>, vector<1x1x8x128xf32>
    %52 = vector.shape_cast %51 : vector<1x1x8x128xf32> to vector<8x128xf32>
    %c0_6 = arith.constant 0 : index
    %c2_7 = arith.constant 2 : index
    %53 = arith.index_cast %46 : i32 to index
    %c0_8 = arith.constant 0 : index
    %54 = vector.load %arg3[%c0_6, %c2_7, %53, %c0_8] : memref<1x6x8x128xf32, #tpu.memory_space<vmem>>, vector<1x1x8x128xf32>
    %55 = vector.shape_cast %54 : vector<1x1x8x128xf32> to vector<8x128xf32>
    %c0_9 = arith.constant 0 : index
    %c3_10 = arith.constant 3 : index
    %56 = arith.index_cast %46 : i32 to index
    %c0_11 = arith.constant 0 : index
    %57 = vector.load %arg3[%c0_9, %c3_10, %56, %c0_11] : memref<1x6x8x128xf32, #tpu.memory_space<vmem>>, vector<1x1x8x128xf32>
    %58 = vector.shape_cast %57 : vector<1x1x8x128xf32> to vector<8x128xf32>
    %c0_12 = arith.constant 0 : index
    %c4_13 = arith.constant 4 : index
    %59 = arith.index_cast %46 : i32 to index
    %c0_14 = arith.constant 0 : index
    %60 = vector.load %arg3[%c0_12, %c4_13, %59, %c0_14] : memref<1x6x8x128xf32, #tpu.memory_space<vmem>>, vector<1x1x8x128xf32>
    %61 = vector.shape_cast %60 : vector<1x1x8x128xf32> to vector<8x128xf32>
    %c0_15 = arith.constant 0 : index
    %c5_16 = arith.constant 5 : index
    %62 = arith.index_cast %46 : i32 to index
    %c0_17 = arith.constant 0 : index
    %63 = vector.load %arg3[%c0_15, %c5_16, %62, %c0_17] : memref<1x6x8x128xf32, #tpu.memory_space<vmem>>, vector<1x1x8x128xf32>
    %64 = vector.shape_cast %63 : vector<1x1x8x128xf32> to vector<8x128xf32>
    %65 = vector.broadcast %0 : f32 to vector<8x128xf32>
    %66 = arith.mulf %49, %65 : vector<8x128xf32>
    %67 = vector.broadcast %1 : f32 to vector<8x128xf32>
    %68 = arith.mulf %52, %67 : vector<8x128xf32>
    %69 = arith.addf %66, %68 : vector<8x128xf32>
    %70 = vector.broadcast %2 : f32 to vector<8x128xf32>
    %71 = arith.mulf %55, %70 : vector<8x128xf32>
    %72 = arith.addf %69, %71 : vector<8x128xf32>
    %73 = vector.broadcast %3 : f32 to vector<8x128xf32>
    %74 = arith.mulf %58, %73 : vector<8x128xf32>
    %75 = arith.addf %72, %74 : vector<8x128xf32>
    %76 = vector.broadcast %4 : f32 to vector<8x128xf32>
    %77 = arith.mulf %61, %76 : vector<8x128xf32>
    %78 = arith.addf %75, %77 : vector<8x128xf32>
    %79 = vector.broadcast %5 : f32 to vector<8x128xf32>
    %80 = arith.mulf %64, %79 : vector<8x128xf32>
    %81 = arith.addf %78, %80 : vector<8x128xf32>
    %82 = vector.broadcast %18 : f32 to vector<8x128xf32>
    %83 = arith.addf %81, %82 : vector<8x128xf32>
    %cst = arith.constant 0.000000e+00 : f32
    %84 = vector.broadcast %cst : f32 to vector<8x128xf32>
    %85 = arith.maximumf %83, %84 : vector<8x128xf32>
    %c0_18 = arith.constant 0 : index
    %c0_19 = arith.constant 0 : index
    %86 = arith.index_cast %46 : i32 to index
    %c0_20 = arith.constant 0 : index
    %87 = vector.load %arg4[%c0_18, %c0_19, %86, %c0_20] : memref<1x3x8x128xf32, #tpu.memory_space<vmem>>, vector<1x1x8x128xf32>
    %88 = vector.shape_cast %87 : vector<1x1x8x128xf32> to vector<8x128xf32>
    %89 = vector.shape_cast %85 : vector<8x128xf32> to vector<1x1x8x128xf32>
    tpu.vector_store %arg4[%c0_18, %c0_19, %86, %c0_20], %89 {strides = array<i32>} : memref<1x3x8x128xf32, #tpu.memory_space<vmem>>, vector<1x1x8x128xf32>,
    %90 = vector.broadcast %6 : f32 to vector<8x128xf32>
    %91 = arith.mulf %49, %90 : vector<8x128xf32>
    %92 = vector.broadcast %7 : f32 to vector<8x128xf32>
    %93 = arith.mulf %52, %92 : vector<8x128xf32>
    %94 = arith.addf %91, %93 : vector<8x128xf32>
    %95 = vector.broadcast %8 : f32 to vector<8x128xf32>
    %96 = arith.mulf %55, %95 : vector<8x128xf32>
    %97 = arith.addf %94, %96 : vector<8x128xf32>
    %98 = vector.broadcast %9 : f32 to vector<8x128xf32>
    %99 = arith.mulf %58, %98 : vector<8x128xf32>
    %100 = arith.addf %97, %99 : vector<8x128xf32>
    %101 = vector.broadcast %10 : f32 to vector<8x128xf32>
    %102 = arith.mulf %61, %101 : vector<8x128xf32>
    %103 = arith.addf %100, %102 : vector<8x128xf32>
    %104 = vector.broadcast %11 : f32 to vector<8x128xf32>
    %105 = arith.mulf %64, %104 : vector<8x128xf32>
    %106 = arith.addf %103, %105 : vector<8x128xf32>
    %107 = vector.broadcast %19 : f32 to vector<8x128xf32>
    %108 = arith.addf %106, %107 : vector<8x128xf32>
    %cst_21 = arith.constant 0.000000e+00 : f32
    %109 = vector.broadcast %cst_21 : f32 to vector<8x128xf32>
    %110 = arith.maximumf %108, %109 : vector<8x128xf32>
    %c0_22 = arith.constant 0 : index
    %c1_23 = arith.constant 1 : index
    %111 = arith.index_cast %46 : i32 to index
    %c0_24 = arith.constant 0 : index
    %112 = vector.load %arg4[%c0_22, %c1_23, %111, %c0_24] : memref<1x3x8x128xf32, #tpu.memory_space<vmem>>, vector<1x1x8x128xf32>
    %113 = vector.shape_cast %112 : vector<1x1x8x128xf32> to vector<8x128xf32>
    %114 = vector.shape_cast %110 : vector<8x128xf32> to vector<1x1x8x128xf32>
    tpu.vector_store %arg4[%c0_22, %c1_23, %111, %c0_24], %114 {strides = array<i32>} : memref<1x3x8x128xf32, #tpu.memory_space<vmem>>, vector<1x1x8x128xf32>,
    %115 = vector.broadcast %12 : f32 to vector<8x128xf32>
    %116 = arith.mulf %49, %115 : vector<8x128xf32>
    %117 = vector.broadcast %13 : f32 to vector<8x128xf32>
    %118 = arith.mulf %52, %117 : vector<8x128xf32>
    %119 = arith.addf %116, %118 : vector<8x128xf32>
    %120 = vector.broadcast %14 : f32 to vector<8x128xf32>
    %121 = arith.mulf %55, %120 : vector<8x128xf32>
    %122 = arith.addf %119, %121 : vector<8x128xf32>
    %123 = vector.broadcast %15 : f32 to vector<8x128xf32>
    %124 = arith.mulf %58, %123 : vector<8x128xf32>
    %125 = arith.addf %122, %124 : vector<8x128xf32>
    %126 = vector.broadcast %16 : f32 to vector<8x128xf32>
    %127 = arith.mulf %61, %126 : vector<8x128xf32>
    %128 = arith.addf %125, %127 : vector<8x128xf32>
    %129 = vector.broadcast %17 : f32 to vector<8x128xf32>
    %130 = arith.mulf %64, %129 : vector<8x128xf32>
    %131 = arith.addf %128, %130 : vector<8x128xf32>
    %132 = vector.broadcast %20 : f32 to vector<8x128xf32>
    %133 = arith.addf %131, %132 : vector<8x128xf32>
    %cst_25 = arith.constant 0.000000e+00 : f32
    %134 = vector.broadcast %cst_25 : f32 to vector<8x128xf32>
    %135 = arith.maximumf %133, %134 : vector<8x128xf32>
    %c0_26 = arith.constant 0 : index
    %c2_27 = arith.constant 2 : index
    %136 = arith.index_cast %46 : i32 to index
    %c0_28 = arith.constant 0 : index
    %137 = vector.load %arg4[%c0_26, %c2_27, %136, %c0_28] : memref<1x3x8x128xf32, #tpu.memory_space<vmem>>, vector<1x1x8x128xf32>
    %138 = vector.shape_cast %137 : vector<1x1x8x128xf32> to vector<8x128xf32>
    %139 = vector.shape_cast %135 : vector<8x128xf32> to vector<1x1x8x128xf32>
    tpu.vector_store %arg4[%c0_26, %c2_27, %136, %c0_28], %139 {strides = array<i32>} : memref<1x3x8x128xf32, #tpu.memory_space<vmem>>, vector<1x1x8x128xf32>,
    %140 = vector.broadcast %21 : f32 to vector<8x128xf32>
    %141 = arith.mulf %85, %140 : vector<8x128xf32>
    %142 = vector.broadcast %22 : f32 to vector<8x128xf32>
    %143 = arith.mulf %110, %142 : vector<8x128xf32>
    %144 = arith.addf %141, %143 : vector<8x128xf32>
    %145 = vector.broadcast %23 : f32 to vector<8x128xf32>
    %146 = arith.mulf %135, %145 : vector<8x128xf32>
    %147 = arith.addf %144, %146 : vector<8x128xf32>
    %148 = vector.broadcast %39 : f32 to vector<8x128xf32>
    %149 = arith.addf %147, %148 : vector<8x128xf32>
    %cst_29 = arith.constant 0.000000e+00 : f32
    %150 = vector.broadcast %cst_29 : f32 to vector<8x128xf32>
    %151 = arith.maximumf %149, %150 : vector<8x128xf32>
    %c0_30 = arith.constant 0 : index
    %c0_31 = arith.constant 0 : index
    %152 = arith.index_cast %46 : i32 to index
    %c0_32 = arith.constant 0 : index
    %153 = vector.load %arg5[%c0_30, %c0_31, %152, %c0_32] : memref<1x6x8x128xf32, #tpu.memory_space<vmem>>, vector<1x1x8x128xf32>
    %154 = vector.shape_cast %153 : vector<1x1x8x128xf32> to vector<8x128xf32>
    %155 = vector.shape_cast %151 : vector<8x128xf32> to vector<1x1x8x128xf32>
    tpu.vector_store %arg5[%c0_30, %c0_31, %152, %c0_32], %155 {strides = array<i32>} : memref<1x6x8x128xf32, #tpu.memory_space<vmem>>, vector<1x1x8x128xf32>,
    %156 = vector.broadcast %24 : f32 to vector<8x128xf32>
    %157 = arith.mulf %85, %156 : vector<8x128xf32>
    %158 = vector.broadcast %25 : f32 to vector<8x128xf32>
    %159 = arith.mulf %110, %158 : vector<8x128xf32>
    %160 = arith.addf %157, %159 : vector<8x128xf32>
    %161 = vector.broadcast %26 : f32 to vector<8x128xf32>
    %162 = arith.mulf %135, %161 : vector<8x128xf32>
    %163 = arith.addf %160, %162 : vector<8x128xf32>
    %164 = vector.broadcast %40 : f32 to vector<8x128xf32>
    %165 = arith.addf %163, %164 : vector<8x128xf32>
    %cst_33 = arith.constant 0.000000e+00 : f32
    %166 = vector.broadcast %cst_33 : f32 to vector<8x128xf32>
    %167 = arith.maximumf %165, %166 : vector<8x128xf32>
    %c0_34 = arith.constant 0 : index
    %c1_35 = arith.constant 1 : index
    %168 = arith.index_cast %46 : i32 to index
    %c0_36 = arith.constant 0 : index
    %169 = vector.load %arg5[%c0_34, %c1_35, %168, %c0_36] : memref<1x6x8x128xf32, #tpu.memory_space<vmem>>, vector<1x1x8x128xf32>
    %170 = vector.shape_cast %169 : vector<1x1x8x128xf32> to vector<8x128xf32>
    %171 = vector.shape_cast %167 : vector<8x128xf32> to vector<1x1x8x128xf32>
    tpu.vector_store %arg5[%c0_34, %c1_35, %168, %c0_36], %171 {strides = array<i32>} : memref<1x6x8x128xf32, #tpu.memory_space<vmem>>, vector<1x1x8x128xf32>,
    %172 = vector.broadcast %27 : f32 to vector<8x128xf32>
    %173 = arith.mulf %85, %172 : vector<8x128xf32>
    %174 = vector.broadcast %28 : f32 to vector<8x128xf32>
    %175 = arith.mulf %110, %174 : vector<8x128xf32>
    %176 = arith.addf %173, %175 : vector<8x128xf32>
    %177 = vector.broadcast %29 : f32 to vector<8x128xf32>
    %178 = arith.mulf %135, %177 : vector<8x128xf32>
    %179 = arith.addf %176, %178 : vector<8x128xf32>
    %180 = vector.broadcast %41 : f32 to vector<8x128xf32>
    %181 = arith.addf %179, %180 : vector<8x128xf32>
    %cst_37 = arith.constant 0.000000e+00 : f32
    %182 = vector.broadcast %cst_37 : f32 to vector<8x128xf32>
    %183 = arith.maximumf %181, %182 : vector<8x128xf32>
    %c0_38 = arith.constant 0 : index
    %c2_39 = arith.constant 2 : index
    %184 = arith.index_cast %46 : i32 to index
    %c0_40 = arith.constant 0 : index
    %185 = vector.load %arg5[%c0_38, %c2_39, %184, %c0_40] : memref<1x6x8x128xf32, #tpu.memory_space<vmem>>, vector<1x1x8x128xf32>
    %186 = vector.shape_cast %185 : vector<1x1x8x128xf32> to vector<8x128xf32>
    %187 = vector.shape_cast %183 : vector<8x128xf32> to vector<1x1x8x128xf32>
    tpu.vector_store %arg5[%c0_38, %c2_39, %184, %c0_40], %187 {strides = array<i32>} : memref<1x6x8x128xf32, #tpu.memory_space<vmem>>, vector<1x1x8x128xf32>,
    %188 = vector.broadcast %30 : f32 to vector<8x128xf32>
    %189 = arith.mulf %85, %188 : vector<8x128xf32>
    %190 = vector.broadcast %31 : f32 to vector<8x128xf32>
    %191 = arith.mulf %110, %190 : vector<8x128xf32>
    %192 = arith.addf %189, %191 : vector<8x128xf32>
    %193 = vector.broadcast %32 : f32 to vector<8x128xf32>
    %194 = arith.mulf %135, %193 : vector<8x128xf32>
    %195 = arith.addf %192, %194 : vector<8x128xf32>
    %196 = vector.broadcast %42 : f32 to vector<8x128xf32>
    %197 = arith.addf %195, %196 : vector<8x128xf32>
    %cst_41 = arith.constant 0.000000e+00 : f32
    %198 = vector.broadcast %cst_41 : f32 to vector<8x128xf32>
    %199 = arith.maximumf %197, %198 : vector<8x128xf32>
    %c0_42 = arith.constant 0 : index
    %c3_43 = arith.constant 3 : index
    %200 = arith.index_cast %46 : i32 to index
    %c0_44 = arith.constant 0 : index
    %201 = vector.load %arg5[%c0_42, %c3_43, %200, %c0_44] : memref<1x6x8x128xf32, #tpu.memory_space<vmem>>, vector<1x1x8x128xf32>
    %202 = vector.shape_cast %201 : vector<1x1x8x128xf32> to vector<8x128xf32>
    %203 = vector.shape_cast %199 : vector<8x128xf32> to vector<1x1x8x128xf32>
    tpu.vector_store %arg5[%c0_42, %c3_43, %200, %c0_44], %203 {strides = array<i32>} : memref<1x6x8x128xf32, #tpu.memory_space<vmem>>, vector<1x1x8x128xf32>,
    %204 = vector.broadcast %33 : f32 to vector<8x128xf32>
    %205 = arith.mulf %85, %204 : vector<8x128xf32>
    %206 = vector.broadcast %34 : f32 to vector<8x128xf32>
    %207 = arith.mulf %110, %206 : vector<8x128xf32>
    %208 = arith.addf %205, %207 : vector<8x128xf32>
    %209 = vector.broadcast %35 : f32 to vector<8x128xf32>
    %210 = arith.mulf %135, %209 : vector<8x128xf32>
    %211 = arith.addf %208, %210 : vector<8x128xf32>
    %212 = vector.broadcast %43 : f32 to vector<8x128xf32>
    %213 = arith.addf %211, %212 : vector<8x128xf32>
    %cst_45 = arith.constant 0.000000e+00 : f32
    %214 = vector.broadcast %cst_45 : f32 to vector<8x128xf32>
    %215 = arith.maximumf %213, %214 : vector<8x128xf32>
    %c0_46 = arith.constant 0 : index
    %c4_47 = arith.constant 4 : index
    %216 = arith.index_cast %46 : i32 to index
    %c0_48 = arith.constant 0 : index
    %217 = vector.load %arg5[%c0_46, %c4_47, %216, %c0_48] : memref<1x6x8x128xf32, #tpu.memory_space<vmem>>, vector<1x1x8x128xf32>
    %218 = vector.shape_cast %217 : vector<1x1x8x128xf32> to vector<8x128xf32>
    %219 = vector.shape_cast %215 : vector<8x128xf32> to vector<1x1x8x128xf32>
    tpu.vector_store %arg5[%c0_46, %c4_47, %216, %c0_48], %219 {strides = array<i32>} : memref<1x6x8x128xf32, #tpu.memory_space<vmem>>, vector<1x1x8x128xf32>,
    %220 = vector.broadcast %36 : f32 to vector<8x128xf32>
    %221 = arith.mulf %85, %220 : vector<8x128xf32>
    %222 = vector.broadcast %37 : f32 to vector<8x128xf32>
    %223 = arith.mulf %110, %222 : vector<8x128xf32>
    %224 = arith.addf %221, %223 : vector<8x128xf32>
    %225 = vector.broadcast %38 : f32 to vector<8x128xf32>
    %226 = arith.mulf %135, %225 : vector<8x128xf32>
    %227 = arith.addf %224, %226 : vector<8x128xf32>
    %228 = vector.broadcast %44 : f32 to vector<8x128xf32>
    %229 = arith.addf %227, %228 : vector<8x128xf32>
    %cst_49 = arith.constant 0.000000e+00 : f32
    %230 = vector.broadcast %cst_49 : f32 to vector<8x128xf32>
    %231 = arith.maximumf %229, %230 : vector<8x128xf32>
    %c0_50 = arith.constant 0 : index
    %c5_51 = arith.constant 5 : index
    %232 = arith.index_cast %46 : i32 to index
    %c0_52 = arith.constant 0 : index
    %233 = vector.load %arg5[%c0_50, %c5_51, %232, %c0_52] : memref<1x6x8x128xf32, #tpu.memory_space<vmem>>, vector<1x1x8x128xf32>
    %234 = vector.shape_cast %233 : vector<1x1x8x128xf32> to vector<8x128xf32>
    %235 = vector.shape_cast %231 : vector<8x128xf32> to vector<1x1x8x128xf32>
    tpu.vector_store %arg5[%c0_50, %c5_51, %232, %c0_52], %235 {strides = array<i32>} : memref<1x6x8x128xf32, #tpu.memory_space<vmem>>, vector<1x1x8x128xf32>,
    %c1_i32 = arith.constant 1 : i32
    return
  }
  func.func @transform_0(%arg0: i32, %arg1: i32) -> i32 {
    %c0_i32 = arith.constant 0 : i32
    %c0_i32_0 = arith.constant 0 : i32
    return %c0_i32 : i32
  }
  func.func @transform_1(%arg0: i32, %arg1: i32) -> (i32, i32, i32, i32) {
    %c0_i32 = arith.constant 0 : i32
    %c0_i32_0 = arith.constant 0 : i32
    %c0_i32_1 = arith.constant 0 : i32
    return %arg0, %c0_i32, %arg1, %c0_i32_0 : i32, i32, i32, i32
  }
  func.func @transform_2(%arg0: i32, %arg1: i32) -> (i32, i32, i32, i32) {
    %c0_i32 = arith.constant 0 : i32
    %c0_i32_0 = arith.constant 0 : i32
    %c0_i32_1 = arith.constant 0 : i32
    return %arg0, %c0_i32, %arg1, %c0_i32_0 : i32, i32, i32, i32
  }
  func.func @transform_3(%arg0: i32, %arg1: i32) -> (i32, i32, i32, i32) {
    %c0_i32 = arith.constant 0 : i32
    %c0_i32_0 = arith.constant 0 : i32
    %c0_i32_1 = arith.constant 0 : i32
    return %arg0, %c0_i32, %arg1, %c0_i32_0 : i32, i32, i32, i32
  }
}

</mosaic_0001>

<llo_original>
// kernel: tpu_custom_call.1
$region0: #{tpu_custom_call.1}
  #allocation0 [shape = 'u32[]', space=smem, size = 0x4, offset = 0x4, fixed_abs, tag = 'smem constant byte address 0x4 - core index']
  #allocation1 [shape = 'u32[144,128]{1,0:T(1,128)}', space=vmem, size = 0x12000, scoped, tag = 'internal scratch']
  %s0 = inlined_call_operand.hbm [shape: f32[45], index: 0, kind: input, shape index: {}]
  %s1 = inlined_call_operand.hbm [shape: f32[2,6,8,128], index: 1, kind: input, shape index: {}]
  %s2 = inlined_call_operand.hbm [shape: f32[2,3,8,128], index: 2, kind: output, shape index: {0}]
  %s3 = inlined_call_operand.hbm [shape: f32[2,6,8,128], index: 3, kind: output, shape index: {1}]
  %4 = xla_tuple %s2, %s3
  %s5 = sld [smem:[#allocation0]]
  $region57: #{tpu_custom_call.1} parent=0
    _
  %s7 = ssub.s32 1, %s5
  %s8 = scalar_select 0, %s7, %s5
  $region1: #{tpu_custom_call.1} parent=0
    #allocation2 [shape = 'u8[512]{0}', space=smem, size = 0x200, scoped, tag = 'input window, operand 0, single buffered']
    #allocation3 [shape = 's32[2]{0}', space=sflag, size = 0x8, scoped, tag = 'scoped memory for tpu_custom_call.1']
    #allocation4 [shape = 's32[2]{0}', space=sflag, size = 0x8, scoped, tag = 'scoped memory for tpu_custom_call.1']
    #allocation5 [shape = 's32[2]{0}', space=sflag, size = 0x8, scoped, tag = 'scoped memory for tpu_custom_call.1']
    #allocation6 [shape = 'u8[49152]{0}', space=vmem, size = 0xc000, scoped, tag = 'input window, operand 1']
    #allocation7 [shape = 'u8[24576]{0}', space=vmem, size = 0x6000, scoped, tag = 'output window, operand 0']
    #allocation8 [shape = 'u8[49152]{0}', space=vmem, size = 0xc000, scoped, tag = 'output window, operand 1']
    #allocation9 [shape = 's32[2]{0}', space=sflag, size = 0x8, scoped, tag = 'scoped memory for tpu_custom_call.1']
    %9 = vsyncpa [#allocation5], 0
    %10 = vsyncpa [#allocation3], 0
    %s11 = scalar_lea.sflag [#allocation3], 1
    %12 = vsyncpa %s11, 0
    %13 = vsyncpa [#allocation4], 0
    %s14 = scalar_lea.sflag [#allocation4], 1
    %15 = vsyncpa %s14, 0
    %16 = vsyncpa [#allocation9], 0
    %s17 = scalar_lea.sflag [#allocation9], 1
    %18 = vsyncpa %s17, 0
    loop: start=0, step=1, limit=4
    $region2: #{tpu_custom_call.1} parent=1 // loop_pre_header
      _
    $region3: #{tpu_custom_call.1} parent=1 // loop_header
      %s20 = sphi 0, %s24
      %p21 = scmp.ge.s32.totalorder %s20, 4
      %s27 = sphi 0, %s39
      %s28 = sphi 0, %s35
      %s29 = sphi 0, %s27
      %s30 = sphi 0, %s28
      %s31 = sphi 0, %s29
      %s32 = sphi 0, %s30
      %s40 = sphi 0, %s40
      %s42 = sphi 0, %s40
      %s43 = sphi 0, %s42
      %s57 = sphi 0, %s43
      %s65 = sphi 0, %s67
      %s68 = sphi 0, %s65
      %s69 = sphi 0, %s68
      %s85 = sphi 0, %s69
      %s93 = sphi 0, %s95
      %s96 = sphi 0, %s93
      %s97 = sphi 0, %s96
      %s113 = sphi 0, %s97
      %s121 = sphi 0, %s123
      %s124 = sphi 0, %s121
      %s125 = sphi 0, %s124
      %s141 = sphi 0, %s125
    $region4: #{tpu_custom_call.1} parent=1 // loop_header_branch
      %23 = sbr.rel (%p21) target = $region8
    $region5: #{tpu_custom_call.1} parent=1 // loop_body
      %s25 = ssub.s32 %s20, 1
      %s26 = ssub.s32 %s20, 2
      %s33 = sadd.s32 1, %s28
      %p34 = scmp.ge.s32.totalorder %s33, 1
      %s35 = scalar_select %p34, 0, %s33
      %s36 = sadd.s32 1, %s27
      %s37 = scalar_select %p34, %s36, %s27
      %p38 = scmp.ge.s32.totalorder %s37, 2
      %s39 = scalar_select %p38, 0, %s37
      %s41 = sadd.s32 %s40, 1
      %p44 = scmp.eq.s32.totalorder %s20, 1
      %p45 = scmp.ne.s32.totalorder %s40, %s42
      %p46 = scmp.eq.s32.totalorder %s20, 0
      %p47 = por %p45, %p46
      %p48 = scmp.ne.s32.totalorder %s40, %s42
      %p49 = scmp.eq.s32.totalorder %s25, 1
      %p50 = por %p48, %p49
      %p51 = scmp.ne.s32.totalorder %s42, %s43
      %p52 = scmp.eq.s32.totalorder %s25, 0
      %p53 = por %p51, %p52
      %p54 = scmp.ne.s32.totalorder %s42, %s43
      %p55 = scmp.eq.s32.totalorder %s26, 1
      %p56 = por %p54, %p55
      %p58 = scmp.ne.s32.totalorder %s43, %s57
      %p59 = scmp.eq.s32.totalorder %s26, 0
      %p60 = por %p58, %p59
      %s61 = ssub.s32 %s27, %s39
      %s62 = ssub.s32 %s28, %s35
      %s63 = sor.u32 %s61, %s62
      %p64 = scmp.eq.s32.totalorder %s63, 0
      %s66 = sadd.s32 %s65, 1
      %s67 = scalar_select %p64, %s65, %s66
      %p70 = pneg %p64
      %p71 = scmp.eq.s32.totalorder %s20, 1
      %p72 = por %p70, %p71
      %p73 = scmp.ne.s32.totalorder %s65, %s68
      %p74 = scmp.eq.s32.totalorder %s20, 0
      %p75 = por %p73, %p74
      %p76 = scmp.ne.s32.totalorder %s65, %s68
      %p77 = scmp.eq.s32.totalorder %s25, 1
      %p78 = por %p76, %p77
      %p79 = scmp.ne.s32.totalorder %s68, %s69
      %p80 = scmp.eq.s32.totalorder %s25, 0
      %p81 = por %p79, %p80
      %p82 = scmp.ne.s32.totalorder %s68, %s69
      %p83 = scmp.eq.s32.totalorder %s26, 1
      %p84 = por %p82, %p83
      %p86 = scmp.ne.s32.totalorder %s69, %s85
      %p87 = scmp.eq.s32.totalorder %s26, 0
      %p88 = por %p86, %p87
      %s89 = ssub.s32 %s27, %s39
      %s90 = ssub.s32 %s28, %s35
      %s91 = sor.u32 %s89, %s90
      %p92 = scmp.eq.s32.totalorder %s91, 0
      %s94 = sadd.s32 %s93, 1
      %s95 = scalar_select %p92, %s93, %s94
      %p98 = pneg %p92
      %p99 = scmp.eq.s32.totalorder %s20, 1
      %p100 = por %p98, %p99
      %p101 = scmp.ne.s32.totalorder %s93, %s96
      %p102 = scmp.eq.s32.totalorder %s20, 0
      %p103 = por %p101, %p102
      %p104 = scmp.ne.s32.totalorder %s93, %s96
      %p105 = scmp.eq.s32.totalorder %s25, 1
      %p106 = por %p104, %p105
      %p107 = scmp.ne.s32.totalorder %s96, %s97
      %p108 = scmp.eq.s32.totalorder %s25, 0
      %p109 = por %p107, %p108
      %p110 = scmp.ne.s32.totalorder %s96, %s97
      %p111 = scmp.eq.s32.totalorder %s26, 1
      %p112 = por %p110, %p111
      %p114 = scmp.ne.s32.totalorder %s97, %s113
      %p115 = scmp.eq.s32.totalorder %s26, 0
      %p116 = por %p114, %p115
      %s117 = ssub.s32 %s27, %s39
      %s118 = ssub.s32 %s28, %s35
      %s119 = sor.u32 %s117, %s118
      %p120 = scmp.eq.s32.totalorder %s119, 0
      %s122 = sadd.s32 %s121, 1
      %s123 = scalar_select %p120, %s121, %s122
      %p126 = pneg %p120
      %p127 = scmp.eq.s32.totalorder %s20, 1
      %p128 = por %p126, %p127
      %p129 = scmp.ne.s32.totalorder %s121, %s124
      %p130 = scmp.eq.s32.totalorder %s20, 0
      %p131 = por %p129, %p130
      %p132 = scmp.ne.s32.totalorder %s121, %s124
      %p133 = scmp.eq.s32.totalorder %s25, 1
      %p134 = por %p132, %p133
      %p135 = scmp.ne.s32.totalorder %s124, %s125
      %p136 = scmp.eq.s32.totalorder %s25, 0
      %p137 = por %p135, %p136
      %p138 = scmp.ne.s32.totalorder %s124, %s125
      %p139 = scmp.eq.s32.totalorder %s26, 1
      %p140 = por %p138, %p139
      %p142 = scmp.ne.s32.totalorder %s125, %s141
      %p143 = scmp.eq.s32.totalorder %s26, 0
      %p144 = por %p142, %p143
      %p145 = scmp.le.s32.totalorder 1, %s20
      %p146 = scmp.lt.s32.totalorder %s20, 3
      %p147 = pnand %p145, %p146
      %p148 = pneg %p147
      // Predicated region
      $region9: #{tpu_custom_call.1} parent=5 // pred_check
        _
      $region10: #{tpu_custom_call.1} parent=5 // pred_check_branch
        %150 = sbr.rel (%p147) target = $region12
      $region11: #{tpu_custom_call.1} parent=5 // pred_region
        %s151 = ssub.s32 %s20, 1
        // Predicated region
        $region13: #{tpu_custom_call.1} parent=11 // pred_check
          %p152 = pneg %p53
        $region14: #{tpu_custom_call.1} parent=11 // pred_check_branch
          %154 = sbr.rel (%p152) target = $region16
        $region15: #{tpu_custom_call.1} parent=11 // pred_region
          %s156 = ssub.s32 16, 16
          %157 = vsyncadd [#allocation5], %s156
          %160 = dma.hbm_to_smem %s0, 16, [#allocation2], [#allocation5]
        $region16: #{tpu_custom_call.1} parent=11 // pred_fallthru
          _
      $region12: #{tpu_custom_call.1} parent=5 // pred_fallthru
        _
      %p161 = scmp.lt.s32.totalorder %s20, 2
      // Predicated region
      $region17: #{tpu_custom_call.1} parent=5 // pred_check
        %p162 = pneg %p161
      $region18: #{tpu_custom_call.1} parent=5 // pred_check_branch
        %164 = sbr.rel (%p162) target = $region20
      $region19: #{tpu_custom_call.1} parent=5 // pred_region
        // Predicated region
        $region21: #{tpu_custom_call.1} parent=19 // pred_check
          %p165 = pneg %p75
        $region22: #{tpu_custom_call.1} parent=19 // pred_check_branch
          %167 = sbr.rel (%p165) target = $region24
        $region23: #{tpu_custom_call.1} parent=19 // pred_region
          %s168 = sand.u32 %s65, 1
          %s169 = scalar_lea.sflag [#allocation3], %s168
          %s170 = sand.u32 %s65, 1
          %s171 = smul.addr %s170, 48
          %s172 = scalar_lea.vmem [#allocation6], %s171
          %s174 = ssub.s32 768, 768
          %175 = vsyncadd %s169, %s174
          %s176 = smul.addr %s27, 6
          %s177 = sadd.s32 %s28, %s176
          %s178 = smul.addr %s177, 128
          %s179 = scalar_lea.hbm %s1, %s178
          %s180 = sshll.u32 %s172, 4
          %s181 = int_to_ptr.vmem [resolvable:$true] %s180
          %186 = dma.hbm_to_vmem [thread:$0]  %s179, 768, %s181, %s169, 128, 128, 8
        $region24: #{tpu_custom_call.1} parent=19 // pred_fallthru
          _
      $region20: #{tpu_custom_call.1} parent=5 // pred_fallthru
        _
      %p187 = scmp.le.s32.totalorder 1, %s20
      %p188 = scmp.lt.s32.totalorder %s20, 3
      %p189 = pnand %p187, %p188
      %p190 = pneg %p189
      // Predicated region
      $region25: #{tpu_custom_call.1} parent=5 // pred_check
        _
      $region26: #{tpu_custom_call.1} parent=5 // pred_check_branch
        %192 = sbr.rel (%p189) target = $region28
      $region27: #{tpu_custom_call.1} parent=5 // pred_region
        %s193 = ssub.s32 %s20, 1
        // Predicated region
        $region29: #{tpu_custom_call.1} parent=27 // pred_check
          %p194 = pneg %p53
        $region30: #{tpu_custom_call.1} parent=27 // pred_check_branch
          %196 = sbr.rel (%p194) target = $region32
        $region31: #{tpu_custom_call.1} parent=27 // pred_region
          %197 = dma.done [#allocation5], 16
        $region32: #{tpu_custom_call.1} parent=27 // pred_fallthru
          _
        %s198 = sand.u32 %s68, 1
        %s199 = scalar_lea.sflag [#allocation3], %s198
        %s200 = sand.u32 %s68, 1
        %s201 = smul.addr %s200, 48
        %s202 = scalar_lea.vmem [#allocation6], %s201
        // Predicated region
        $region33: #{tpu_custom_call.1} parent=27 // pred_check
          %p203 = pneg %p81
        $region34: #{tpu_custom_call.1} parent=27 // pred_check_branch
          %205 = sbr.rel (%p203) target = $region36
        $region35: #{tpu_custom_call.1} parent=27 // pred_region
          %206 = dma.done %s199, 768
        $region36: #{tpu_custom_call.1} parent=27 // pred_fallthru
          _
        %207 = sfence
        %p208 = pneg %p53
        %p209 = pneg %p50
        %s210 = sand.u32 %s68, 1
        %s211 = scalar_lea.sflag [#allocation3], %s210
        %s212 = sand.u32 %s68, 1
        %s213 = smul.addr %s212, 48
        %s214 = scalar_lea.vmem [#allocation6], %s213
        %p215 = pneg %p81
        %p216 = pneg %p78
        %p217 = pneg %p109
        %p218 = pneg %p106
        %s219 = sand.u32 %s96, 1
        %s220 = scalar_lea.sflag [#allocation4], %s219
        %s221 = sand.u32 %s96, 1
        %s222 = smul.addr %s221, 24
        %s223 = scalar_lea.vmem [#allocation7], %s222
        %p224 = pneg %p137
        %p225 = pneg %p134
        %s226 = sand.u32 %s124, 1
        %s227 = scalar_lea.sflag [#allocation9], %s226
        %s228 = sand.u32 %s124, 1
        %s229 = smul.addr %s228, 48
        %s230 = scalar_lea.vmem [#allocation8], %s229
        %s231 = sld [smem:[#allocation2]]
        %s232 = sld [smem:[#allocation2 + $0x1]]
        %s233 = sld [smem:[#allocation2 + $0x2]]
        %s234 = sld [smem:[#allocation2 + $0x3]]
        %s235 = sld [smem:[#allocation2 + $0x4]]
        %s236 = sld [smem:[#allocation2 + $0x5]]
        %s237 = sld [smem:[#allocation2 + $0x6]]
        %s238 = sld [smem:[#allocation2 + $0x7]]
        %s239 = sld [smem:[#allocation2 + $0x8]]
        %s240 = sld [smem:[#allocation2 + $0x9]]
        %s241 = sld [smem:[#allocation2 + $0xa]]
        %s242 = sld [smem:[#allocation2 + $0xb]]
        %s243 = sld [smem:[#allocation2 + $0xc]]
        %s244 = sld [smem:[#allocation2 + $0xd]]
        %s245 = sld [smem:[#allocation2 + $0xe]]
        %s246 = sld [smem:[#allocation2 + $0xf]]
        %s247 = sld [smem:[#allocation2 + $0x10]]
        %s248 = sld [smem:[#allocation2 + $0x11]]
        %s249 = sld [smem:[#allocation2 + $0x12]]
        %s250 = sld [smem:[#allocation2 + $0x13]]
        %s251 = sld [smem:[#allocation2 + $0x14]]
        %s252 = sld [smem:[#allocation2 + $0x15]]
        %s253 = sld [smem:[#allocation2 + $0x16]]
        %s254 = sld [smem:[#allocation2 + $0x17]]
        %s255 = sld [smem:[#allocation2 + $0x18]]
        %s256 = sld [smem:[#allocation2 + $0x19]]
        %s257 = sld [smem:[#allocation2 + $0x1a]]
        %s258 = sld [smem:[#allocation2 + $0x1b]]
        %s259 = sld [smem:[#allocation2 + $0x1c]]
        %s260 = sld [smem:[#allocation2 + $0x1d]]
        %s261 = sld [smem:[#allocation2 + $0x1e]]
        %s262 = sld [smem:[#allocation2 + $0x1f]]
        %s263 = sld [smem:[#allocation2 + $0x20]]
        %s264 = sld [smem:[#allocation2 + $0x21]]
        %s265 = sld [smem:[#allocation2 + $0x22]]
        %s266 = sld [smem:[#allocation2 + $0x23]]
        %s267 = sld [smem:[#allocation2 + $0x24]]
        %s268 = sld [smem:[#allocation2 + $0x25]]
        %s269 = sld [smem:[#allocation2 + $0x26]]
        %s270 = sld [smem:[#allocation2 + $0x27]]
        %s271 = sld [smem:[#allocation2 + $0x28]]
        %s272 = sld [smem:[#allocation2 + $0x29]]
        %s273 = sld [smem:[#allocation2 + $0x2a]]
        %s274 = sld [smem:[#allocation2 + $0x2b]]
        %s275 = sld [smem:[#allocation2 + $0x2c]]
        %v276 = vld [vmem:[%s202] sm:$0xff]
        %s277 = sadd.s32 0, 8
        %s278 = scalar_lea.vmem %s202, %s277 [#allocation6]
        %v279 = vld [vmem:[%s278] sm:$0xff]
        %s280 = sadd.s32 0, 16
        %s281 = scalar_lea.vmem %s202, %s280 [#allocation6]
        %v282 = vld [vmem:[%s281] sm:$0xff]
        %s283 = sadd.s32 0, 24
        %s284 = scalar_lea.vmem %s202, %s283 [#allocation6]
        %v285 = vld [vmem:[%s284] sm:$0xff]
        %s286 = sadd.s32 0, 32
        %s287 = scalar_lea.vmem %s202, %s286 [#allocation6]
        %v288 = vld [vmem:[%s287] sm:$0xff]
        %s289 = sadd.s32 0, 40
        %s290 = scalar_lea.vmem %s202, %s289 [#allocation6]
        %v291 = vld [vmem:[%s290] sm:$0xff]
        %v292 = vstv %s231
        %v293 = vmul.f32 %v276, %v292
        %v294 = vstv %s232
        %v295 = vmul.f32 %v279, %v294
        %v296 = vadd.f32 %v293, %v295
        %v297 = vstv %s233
        %v298 = vmul.f32 %v282, %v297
        %v299 = vadd.f32 %v296, %v298
        %v300 = vstv %s234
        %v301 = vmul.f32 %v285, %v300
        %v302 = vadd.f32 %v299, %v301
        %v303 = vstv %s235
        %v304 = vmul.f32 %v288, %v303
        %v305 = vadd.f32 %v302, %v304
        %v306 = vstv %s236
        %v307 = vmul.f32 %v291, %v306
        %v308 = vadd.f32 %v305, %v307
        %v309 = vstv %s249
        %v310 = vadd.f32 %v308, %v309
        %v311 = vmax.f32 %v310, 0.0
        %312 = vst [vmem:[%s223] sm:$0xff] %v311
        %v313 = vstv %s237
        %v314 = vmul.f32 %v276, %v313
        %v315 = vstv %s238
        %v316 = vmul.f32 %v279, %v315
        %v317 = vadd.f32 %v314, %v316
        %v318 = vstv %s239
        %v319 = vmul.f32 %v282, %v318
        %v320 = vadd.f32 %v317, %v319
        %v321 = vstv %s240
        %v322 = vmul.f32 %v285, %v321
        %v323 = vadd.f32 %v320, %v322
        %v324 = vstv %s241
        %v325 = vmul.f32 %v288, %v324
        %v326 = vadd.f32 %v323, %v325
        %v327 = vstv %s242
        %v328 = vmul.f32 %v291, %v327
        %v329 = vadd.f32 %v326, %v328
        %v330 = vstv %s250
        %v331 = vadd.f32 %v329, %v330
        %v332 = vmax.f32 %v331, 0.0
        %s333 = scalar_lea.vmem %s223, %s277 [#allocation7]
        %334 = vst [vmem:[%s333] sm:$0xff] %v332
        %v335 = vstv %s243
        %v336 = vmul.f32 %v276, %v335
        %v337 = vstv %s244
        %v338 = vmul.f32 %v279, %v337
        %v339 = vadd.f32 %v336, %v338
        %v340 = vstv %s245
        %v341 = vmul.f32 %v282, %v340
        %v342 = vadd.f32 %v339, %v341
        %v343 = vstv %s246
        %v344 = vmul.f32 %v285, %v343
        %v345 = vadd.f32 %v342, %v344
        %v346 = vstv %s247
        %v347 = vmul.f32 %v288, %v346
        %v348 = vadd.f32 %v345, %v347
        %v349 = vstv %s248
        %v350 = vmul.f32 %v291, %v349
        %v351 = vadd.f32 %v348, %v350
        %v352 = vstv %s251
        %v353 = vadd.f32 %v351, %v352
        %v354 = vmax.f32 %v353, 0.0
        %s355 = scalar_lea.vmem %s223, %s280 [#allocation7]
        %356 = vst [vmem:[%s355] sm:$0xff] %v354
        %v357 = vstv %s252
        %v358 = vmul.f32 %v311, %v357
        %v359 = vstv %s253
        %v360 = vmul.f32 %v332, %v359
        %v361 = vadd.f32 %v358, %v360
        %v362 = vstv %s254
        %v363 = vmul.f32 %v354, %v362
        %v364 = vadd.f32 %v361, %v363
        %v365 = vstv %s270
        %v366 = vadd.f32 %v364, %v365
        %v367 = vmax.f32 %v366, 0.0
        %368 = vst [vmem:[%s230] sm:$0xff] %v367
        %v369 = vstv %s255
        %v370 = vmul.f32 %v311, %v369
        %v371 = vstv %s256
        %v372 = vmul.f32 %v332, %v371
        %v373 = vadd.f32 %v370, %v372
        %v374 = vstv %s257
        %v375 = vmul.f32 %v354, %v374
        %v376 = vadd.f32 %v373, %v375
        %v377 = vstv %s271
        %v378 = vadd.f32 %v376, %v377
        %v379 = vmax.f32 %v378, 0.0
        %s380 = scalar_lea.vmem %s230, %s277 [#allocation8]
        %381 = vst [vmem:[%s380] sm:$0xff] %v379
        %v382 = vstv %s258
        %v383 = vmul.f32 %v311, %v382
        %v384 = vstv %s259
        %v385 = vmul.f32 %v332, %v384
        %v386 = vadd.f32 %v383, %v385
        %v387 = vstv %s260
        %v388 = vmul.f32 %v354, %v387
        %v389 = vadd.f32 %v386, %v388
        %v390 = vstv %s272
        %v391 = vadd.f32 %v389, %v390
        %v392 = vmax.f32 %v391, 0.0
        %s393 = scalar_lea.vmem %s230, %s280 [#allocation8]
        %394 = vst [vmem:[%s393] sm:$0xff] %v392
        %v395 = vstv %s261
        %v396 = vmul.f32 %v311, %v395
        %v397 = vstv %s262
        %v398 = vmul.f32 %v332, %v397
        %v399 = vadd.f32 %v396, %v398
        %v400 = vstv %s263
        %v401 = vmul.f32 %v354, %v400
        %v402 = vadd.f32 %v399, %v401
        %v403 = vstv %s273
        %v404 = vadd.f32 %v402, %v403
        %v405 = vmax.f32 %v404, 0.0
        %s406 = scalar_lea.vmem %s230, %s283 [#allocation8]
        %407 = vst [vmem:[%s406] sm:$0xff] %v405
        %v408 = vstv %s264
        %v409 = vmul.f32 %v311, %v408
        %v410 = vstv %s265
        %v411 = vmul.f32 %v332, %v410
        %v412 = vadd.f32 %v409, %v411
        %v413 = vstv %s266
        %v414 = vmul.f32 %v354, %v413
        %v415 = vadd.f32 %v412, %v414
        %v416 = vstv %s274
        %v417 = vadd.f32 %v415, %v416
        %v418 = vmax.f32 %v417, 0.0
        %s419 = scalar_lea.vmem %s230, %s286 [#allocation8]
        %420 = vst [vmem:[%s419] sm:$0xff] %v418
        %v421 = vstv %s267
        %v422 = vmul.f32 %v311, %v421
        %v423 = vstv %s268
        %v424 = vmul.f32 %v332, %v423
        %v425 = vadd.f32 %v422, %v424
        %v426 = vstv %s269
        %v427 = vmul.f32 %v354, %v426
        %v428 = vadd.f32 %v425, %v427
        %v429 = vstv %s275
        %v430 = vadd.f32 %v428, %v429
        %v431 = vmax.f32 %v430, 0.0
        %s432 = scalar_lea.vmem %s230, %s289 [#allocation8]
        %433 = vst [vmem:[%s432] sm:$0xff] %v431
        %s434 = sand.u32 %s96, 1
        %s435 = scalar_lea.sflag [#allocation4], %s434
        %s436 = sand.u32 %s96, 1
        %s437 = smul.addr %s436, 24
        %s438 = scalar_lea.vmem [#allocation7], %s437
        %s439 = sand.u32 %s124, 1
        %s440 = scalar_lea.sflag [#allocation9], %s439
        %s441 = sand.u32 %s124, 1
        %s442 = smul.addr %s441, 48
        %s443 = scalar_lea.vmem [#allocation8], %s442
        // Predicated region
        $region37: #{tpu_custom_call.1} parent=27 // pred_check
          %p444 = pneg %p106
        $region38: #{tpu_custom_call.1} parent=27 // pred_check_branch
          %446 = sbr.rel (%p444) target = $region40
        $region39: #{tpu_custom_call.1} parent=27 // pred_region
          %s448 = ssub.s32 384, 384
          %449 = vsyncadd %s435, %s448
          %s450 = smul.addr %s29, 3
          %s451 = sadd.s32 %s30, %s450
          %s452 = smul.addr %s451, 128
          %s453 = scalar_lea.hbm %s2, %s452
          %s454 = sshll.u32 %s438, 4
          %s455 = int_to_ptr.vmem [resolvable:$true] %s454
          %460 = dma.vmem_to_hbm [thread:$0]  %s455, 384, %s453, %s435, 128, 128, 8
        $region40: #{tpu_custom_call.1} parent=27 // pred_fallthru
          _
        // Predicated region
        $region41: #{tpu_custom_call.1} parent=27 // pred_check
          %p461 = pneg %p134
        $region42: #{tpu_custom_call.1} parent=27 // pred_check_branch
          %463 = sbr.rel (%p461) target = $region44
        $region43: #{tpu_custom_call.1} parent=27 // pred_region
          %s465 = ssub.s32 768, 768
          %466 = vsyncadd %s440, %s465
          %s467 = smul.addr %s29, 6
          %s468 = sadd.s32 %s30, %s467
          %s469 = smul.addr %s468, 128
          %s470 = scalar_lea.hbm %s3, %s469
          %s471 = sshll.u32 %s443, 4
          %s472 = int_to_ptr.vmem [resolvable:$true] %s471
          %477 = dma.vmem_to_hbm [thread:$0]  %s472, 768, %s470, %s440, 128, 128, 8
        $region44: #{tpu_custom_call.1} parent=27 // pred_fallthru
          _
      $region28: #{tpu_custom_call.1} parent=5 // pred_fallthru
        _
      %p478 = scmp.le.s32.totalorder 2, %s20
      // Predicated region
      $region45: #{tpu_custom_call.1} parent=5 // pred_check
        %p479 = pneg %p478
      $region46: #{tpu_custom_call.1} parent=5 // pred_check_branch
        %481 = sbr.rel (%p479) target = $region48
      $region47: #{tpu_custom_call.1} parent=5 // pred_region
        %s482 = ssub.s32 %s20, 2
        // Predicated region
        $region49: #{tpu_custom_call.1} parent=47 // pred_check
          %p483 = pneg %p112
        $region50: #{tpu_custom_call.1} parent=47 // pred_check_branch
          %485 = sbr.rel (%p483) target = $region52
        $region51: #{tpu_custom_call.1} parent=47 // pred_region
          %s486 = sand.u32 %s97, 1
          %s487 = scalar_lea.sflag [#allocation4], %s486
          %s488 = sand.u32 %s97, 1
          %s489 = smul.addr %s488, 24
          %s490 = scalar_lea.vmem [#allocation7], %s489
          %491 = dma.done %s487, 384
        $region52: #{tpu_custom_call.1} parent=47 // pred_fallthru
          _
        // Predicated region
        $region53: #{tpu_custom_call.1} parent=47 // pred_check
          %p492 = pneg %p140
        $region54: #{tpu_custom_call.1} parent=47 // pred_check_branch
          %494 = sbr.rel (%p492) target = $region56
        $region55: #{tpu_custom_call.1} parent=47 // pred_region
          %s495 = sand.u32 %s125, 1
          %s496 = scalar_lea.sflag [#allocation9], %s495
          %s497 = sand.u32 %s125, 1
          %s498 = smul.addr %s497, 48
          %s499 = scalar_lea.vmem [#allocation8], %s498
          %500 = dma.done %s496, 768
        $region56: #{tpu_custom_call.1} parent=47 // pred_fallthru
          _
      $region48: #{tpu_custom_call.1} parent=5 // pred_fallthru
        _
    $region6: #{tpu_custom_call.1} parent=1 // loop_footer
      %s24 = sadd.s32 1, %s20
    $region7: #{tpu_custom_call.1} parent=1 // loop_footer_branch
      %19 = sbr.rel target = $region3
    $region8: #{tpu_custom_call.1} parent=1 // loop_exit
      _
    %501 = vsyncpa [#allocation3], 1
    %s502 = scalar_lea.sflag [#allocation3], 1
    %503 = vsyncpa %s502, 1
    %504 = vsyncpa [#allocation4], 1
    %s505 = scalar_lea.sflag [#allocation4], 1
    %506 = vsyncpa %s505, 1
    %507 = vsyncpa [#allocation9], 1
    %s508 = scalar_lea.sflag [#allocation9], 1
    %509 = vsyncpa %s508, 1
    %510 = vsyncpa [#allocation5], 1
    %s511 = scalar_lea.sflag [#allocation5], 1
    %512 = vsyncpa %s511, 1

</llo_original>
